<compile_context>
chip_gen: v6e
topology: v6e:2x2x1
jax: 0.10.0
libtpu: 0.0.40
codegen_flags: <defaults>
</compile_context>

<pallas_src>
import functools

import jax
import jax.numpy as jnp
from jax.experimental import pallas as pl
from jax.experimental.pallas import tpu as pltpu


def _round_up(x, m):
    return (x + m - 1) // m * m


def _cdiv(a, b):
    return -(-a // b)


def _pad2d(a, rows, cols):
    pr, pc = rows - a.shape[0], cols - a.shape[1]
    if pr == 0 and pc == 0:
        return a
    return jnp.pad(a, ((0, pr), (0, pc)))


def _pad1d(a, n):
    p = n - a.shape[0]
    if p == 0:
        return a
    return jnp.pad(a, (0, p))


def _vmem_capacity_bytes():
    """Per-core VMEM capacity; conservative 64 MiB (v7x) fallback."""
    try:
        info = pltpu.get_tpu_info()
        for name in ("vmem_capacity_bytes", "vmem_size_bytes", "vmem_bytes"):
            cap = getattr(info, name, None)
            if cap:
                return int(cap)
    except Exception:
        pass
    return 64 * 1024 * 1024


def _plan_tiles(M, d_in, d_hid, x_isz, w_isz, out_isz, budget,
                tm_user=None, tk_user=None):
    """Pick (tm, tk, d_hid_padded, d_in_padded) under a VMEM budget."""
    sub = 8 if x_isz >= 4 else (16 if x_isz == 2 else 32)
    d_in_p = _round_up(d_in, 128)

    def need(tm_, tk_, num_k):
        v = 2 * tm_ * d_in_p * (x_isz + out_isz)            # x & out tiles (dbl-buffered)
        v += 2 * 2 * d_in_p * tk_ * w_isz                   # W1 + W2 chunks (dbl-buffered)
        v += 2 * 4 * (tk_ + 3 * d_in_p)                     # b1, b2, gamma, beta (f32)
        v += tm_ * tk_ * (4 + (w_isz if w_isz < 4 else 0))  # f32 `h` (+ down-cast copy)
        if num_k > 1:
            v += tm_ * d_in_p * 4                           # f32 accumulator scratch
        return v

    tm_target = tm_user if tm_user is not None else (512 if x_isz >= 4 else 1024)
    tm_target = max(sub, min(_round_up(tm_target, sub), _round_up(M, sub)))

    def row_tile(target):
        n = max(1, _cdiv(M, target))
        if n == 1 and M > sub:       # >= 2 row tiles so both v7x TCs get work
            n = 2
        return max(sub, _round_up(_cdiv(M, n), sub))

    tm = row_tile(tm_target)
    while True:
        if tk_user is not None:
            tk = max(128, _round_up(min(tk_user, _round_up(d_hid, 128)), 128))
            d_hid_p = _round_up(d_hid, tk)
            if need(tm, tk, d_hid_p // tk) <= budget or tm == sub:
                return tm, tk, d_hid_p, d_in_p
        else:
            # (a) Collapse reduction: whole W1/W2 VMEM-resident, single k step.
            tk_full = _round_up(d_hid, 128)
            if need(tm, tk_full, 1) <= budget:
                return tm, tk_full, tk_full, d_in_p
            # (b) Chunked reduction: largest tk that fits; pad d_hid UP to it.
            for tk in (512, 256, 128):
                d_hid_p = _round_up(d_hid, tk)
                if need(tm, tk, d_hid_p // tk) <= budget:
                    return tm, tk, d_hid_p, d_in_p
            if tm == sub:
                return tm, 128, _round_up(d_hid, 128), d_in_p
        tm = max(sub, _round_up(tm // 2, sub))   # shrink rows and retry


def _layer_norm(y, gamma, beta, eps, d_in_true):
    """LayerNorm over the (possibly padded) last dim; stats use true d_in."""
    inv_d = 1.0 / d_in_true
    mean = jnp.sum(y, axis=-1, keepdims=True) * inv_d        # padded lanes of y are 0
    cent = y - mean
    if y.shape[-1] != d_in_true:
        lane = jax.lax.broadcasted_iota(jnp.int32, y.shape, 1)
        cent_sq = jnp.where(lane < d_in_true, cent, 0.0)     # mask pads out of variance
    else:
        cent_sq = cent
    var = jnp.sum(cent_sq * cent_sq, axis=-1, keepdims=True) * inv_d
    return cent * jax.lax.rsqrt(var + eps) * gamma + beta


def _ffn_kernel_resident(x_ref, w1_ref, b1_ref, w2_ref, b2_ref, g_ref, beta_ref,
                         o_ref, *, eps, d_in_true):
    """Single reduction step: W1/W2 fully resident. Grid = (row tiles, 1)."""
    x = x_ref[...]
    xm = (x.astype(w1_ref.dtype)
          if jnp.dtype(w1_ref.dtype).itemsize < jnp.dtype(x.dtype).itemsize else x)
    h = jnp.dot(xm, w1_ref[...], preferred_element_type=jnp.float32) + b1_ref[...]
    h = jnp.maximum(h, 0.0)
    y = jnp.dot(h.astype(w2_ref.dtype), w2_ref[...],
                preferred_element_type=jnp.float32)
    # TODO(synk): dropout is identity in eval mode; training-mode dropout would
    # use pltpu.prng_seed / pltpu.prng_random_bits here.
    y = y + b2_ref[...] + x.astype(jnp.float32)
    o_ref[...] = _layer_norm(y, g_ref[...], beta_ref[...],
                             eps, d_in_true).astype(o_ref.dtype)


def _ffn_kernel_chunked(x_ref, w1_ref, b1_ref, w2_ref, b2_ref, g_ref, beta_ref,
                        o_ref, acc_ref, *, eps, d_in_true):
    """Grid = (row tiles, d_hid chunks); the d_hid axis is the reduction."""
    k = pl.program_id(1)

    @pl.when(k == 0)
    def _():
        acc_ref[...] = jnp.zeros_like(acc_ref)

    x = x_ref[...]
    xm = (x.astype(w1_ref.dtype)
          if jnp.dtype(w1_ref.dtype).itemsize < jnp.dtype(x.dtype).itemsize else x)
    h = jnp.dot(xm, w1_ref[...], preferred_element_type=jnp.float32) + b1_ref[...]
    h = jnp.maximum(h, 0.0)
    acc_ref[...] += jnp.dot(h.astype(w2_ref.dtype), w2_ref[...],
                            preferred_element_type=jnp.float32)

    @pl.when(k == pl.num_programs(1) - 1)
    def _():
        y = acc_ref[...] + b2_ref[...] + x.astype(jnp.float32)
        o_ref[...] = _layer_norm(y, g_ref[...], beta_ref[...],
                                 eps, d_in_true).astype(o_ref.dtype)


def positionwise_feed_forward(x, w1, b1, w2, b2, gamma, beta,
                              *, eps=1e-6, tm=None, tk=None, mxu_dtype=None):
    """x: (batch, seq, d_in). w1: (d_in, d_hid), w2: (d_hid, d_in).

    Weights are consumed in their native dtype (bf16 weights -> bf16 MXU path).
    nn.Linear weights must be pre-transposed by the caller.  `mxu_dtype` can
    down-cast matmul operands (e.g. jnp.bfloat16 on v5e/v6e) while keeping f32
    accumulation + f32 LayerNorm.
    """
    batch, seq, d_in = x.shape
    d_hid = w1.shape[1]
    M = batch * seq

    if mxu_dtype is not None:
        w1 = w1.astype(mxu_dtype)
        w2 = w2.astype(mxu_dtype)

    x_isz = jnp.dtype(x.dtype).itemsize
    w_isz = jnp.dtype(w1.dtype).itemsize
    out_isz = x_isz

    cap = _vmem_capacity_bytes()
    vmem_limit = cap * 7 // 8                      # ~56 MiB v7x, ~112 MiB v5e/v6e
    plan_budget = max(vmem_limit - 8 * 1024 * 1024, vmem_limit // 2)

    tm, tk, d_hid_p, d_in_p = _plan_tiles(
        M, d_in, d_hid, x_isz, w_isz, out_isz, plan_budget,
        tm_user=tm, tk_user=tk)
    num_k = d_hid_p // tk
    M_p = _round_up(M, tm)
    num_row_tiles = M_p // tm

    # Lane/sublane-dense padding; all pads are no-ops when already aligned.
    x2d = _pad2d(x.reshape(M, d_in), M_p, d_in_p)
    w1_p = _pad2d(w1, d_in_p, d_hid_p)
    w2_p = _pad2d(w2, d_hid_p, d_in_p)
    b1_p = _pad1d(b1.astype(jnp.float32), d_hid_p).reshape(1, d_hid_p)
    b2_p = _pad1d(b2.astype(jnp.float32), d_in_p).reshape(1, d_in_p)
    g_p = _pad1d(gamma.astype(jnp.float32), d_in_p).reshape(1, d_in_p)
    be_p = _pad1d(beta.astype(jnp.float32), d_in_p).reshape(1, d_in_p)

    # With a collapsed reduction the weight blocks are grid-invariant and are
    # DMA'd once; otherwise they are re-streamed once per row tile.
    weight_bytes = 2 * d_in_p * d_hid_p * w_isz
    cost = pl.CostEstimate(
        flops=int(4 * M * d_in * d_hid),
        transcendentals=int(M),                                   # rsqrt per row
        bytes_accessed=int(M_p * d_in_p * (x_isz + out_isz)
                           + (1 if num_k == 1 else num_row_tiles) * weight_bytes),
    )

    if num_k == 1:
        kernel = functools.partial(_ffn_kernel_resident, eps=eps, d_in_true=d_in)
        scratch = []
    else:
        kernel = functools.partial(_ffn_kernel_chunked, eps=eps, d_in_true=d_in)
        scratch = [pltpu.VMEM((tm, d_in_p), jnp.float32)]

    out2d = pl.pallas_call(
        kernel,
        out_shape=jax.ShapeDtypeStruct((M_p, d_in_p), x.dtype),
        grid_spec=pltpu.PrefetchScalarGridSpec(
            num_scalar_prefetch=0,
            grid=(num_row_tiles, num_k),                 # reduction axis last
            in_specs=[
                pl.BlockSpec((tm, d_in_p), lambda i, k: (i, 0)),   # x tile
                pl.BlockSpec((d_in_p, tk), lambda i, k: (0, k)),   # W1 chunk
                pl.BlockSpec((1, tk), lambda i, k: (0, k)),        # b1 chunk
                pl.BlockSpec((tk, d_in_p), lambda i, k: (k, 0)),   # W2 chunk
                pl.BlockSpec((1, d_in_p), lambda i, k: (0, 0)),    # b2
                pl.BlockSpec((1, d_in_p), lambda i, k: (0, 0)),    # gamma
                pl.BlockSpec((1, d_in_p), lambda i, k: (0, 0)),    # beta
            ],
            out_specs=pl.BlockSpec((tm, d_in_p), lambda i, k: (i, 0)),
            scratch_shapes=scratch,
        ),
        compiler_params=pltpu.CompilerParams(
            dimension_semantics=("parallel", "arbitrary"),
            vmem_limit_bytes=int(vmem_limit),
        ),
        cost_estimate=cost,
    )(x2d, w1_p, b1_p, w2_p, b2_p, g_p, be_p)

    return out2d[:M, :d_in].reshape(batch, seq, d_in)


def _reference(x, w1, b1, w2, b2, gamma, beta, eps=1e-6):
    xf = x.astype(jnp.float32)
    h = jnp.maximum(xf @ w1.astype(jnp.float32) + b1, 0.0)
    y = h @ w2.astype(jnp.float32) + b2
    y = y + xf
    mean = jnp.mean(y, axis=-1, keepdims=True)
    var = jnp.mean((y - mean) ** 2, axis=-1, keepdims=True)
    return ((y - mean) * jax.lax.rsqrt(var + eps) * gamma + beta).astype(x.dtype)


if __name__ == "__main__":
    key = jax.random.PRNGKey(0)

    # ---- small demo shapes (module defaults) ----
    batch, seq, d_in, d_hid = 2, 8, 32, 64
    k_x, k_w1, k_b1, k_w2, k_b2 = jax.random.split(key, 5)

    x = jax.random.normal(k_x, (batch, seq, d_in), dtype=jnp.float32)
    # nn.Linear(d_in,d_hid)/(d_hid,d_in) weights, stored pre-transposed.
    w1 = jax.random.normal(k_w1, (d_in, d_hid), dtype=jnp.float32) * 0.1
    b1 = jax.random.normal(k_b1, (d_hid,), dtype=jnp.float32) * 0.1
    w2 = jax.random.normal(k_w2, (d_hid, d_in), dtype=jnp.float32) * 0.1
    b2 = jax.random.normal(k_b2, (d_in,), dtype=jnp.float32) * 0.1
    gamma = jnp.ones((d_in,), dtype=jnp.float32)
    beta = jnp.zeros((d_in,), dtype=jnp.float32)

    out = positionwise_feed_forward(x, w1, b1, w2, b2, gamma, beta)
    out = jax.block_until_ready(out)
    ref = _reference(x, w1, b1, w2, b2, gamma, beta)
    assert out.shape == (batch, seq, d_in)
    assert jnp.allclose(out, ref, atol=1e-5, rtol=1e-5), "mismatch vs reference"

    # ---- larger shapes: multi-row-tile grid, weights VMEM-resident (k==1) ----
    b2_, s2_, di2, dh2 = 2, 256, 256, 1024
    k_x2, k_w12, k_b12, k_w22, k_b22 = jax.random.split(jax.random.PRNGKey(1), 5)
    x2 = jax.random.normal(k_x2, (b2_, s2_, di2), dtype=jnp.float32)
    w1_2 = jax.random.normal(k_w12, (di2, dh2), dtype=jnp.float32) * 0.05
    b1_2 = jax.random.normal(k_b12, (dh2,), dtype=jnp.float32) * 0.05
    w2_2 = jax.random.normal(k_w22, (dh2, di2), dtype=jnp.float32) * 0.05
    b2_2 = jax.random.normal(k_b22, (di2,), dtype=jnp.float32) * 0.05
    g2 = jnp.ones((di2,), dtype=jnp.float32)
    be2 = jnp.zeros((di2,), dtype=jnp.float32)

    out2 = positionwise_feed_forward(x2, w1_2, b1_2, w2_2, b2_2, g2, be2)
    out2 = jax.block_until_ready(out2)
    ref2 = _reference(x2, w1_2, b1_2, w2_2, b2_2, g2, be2)
    # Slightly looser tolerance: accumulation-order / MXU-pass differences at
    # the larger contraction sizes.
    assert out2.shape == (b2_, s2_, di2)
    assert jnp.allclose(out2, ref2, atol=5e-4, rtol=5e-4), "mismatch (large)"

    # ---- same shapes, but force the chunked-reduction (accumulator) kernel ----
    out3 = positionwise_feed_forward(x2, w1_2, b1_2, w2_2, b2_2, g2, be2,
                                     tm=128, tk=256)
    out3 = jax.block_until_ready(out3)
    assert out3.shape == (b2_, s2_, di2)
    assert jnp.allclose(out3, ref2, atol=5e-4, rtol=5e-4), "mismatch (chunked)"

    print("KERNEL_OK")
</pallas_src>

<mosaic_0001>
module attributes {stable_mosaic.version = 11 : i64} {
  func.func @_ffn_kernel_resident(%arg0: i32, %arg1: i32, %arg2: memref<8x128xf32, #tpu.memory_space<vmem>>, %arg3: memref<128x128xf32, #tpu.memory_space<vmem>>, %arg4: memref<1x128xf32, #tpu.memory_space<vmem>>, %arg5: memref<128x128xf32, #tpu.memory_space<vmem>>, %arg6: memref<1x128xf32, #tpu.memory_space<vmem>>, %arg7: memref<1x128xf32, #tpu.memory_space<vmem>>, %arg8: memref<1x128xf32, #tpu.memory_space<vmem>>, %arg9: memref<8x128xf32, #tpu.memory_space<vmem>>) attributes {dimension_semantics = [#tpu.dimension_semantics<parallel>, #tpu.dimension_semantics<arbitrary>], iteration_bounds = array<i64: 2, 1>, scalar_prefetch = 0 : i64, scratch_operands = 0 : i64, tpu.core_type = #tpu.core_type<tc>, window_params = [{transform_indices = @transform_0, window_bounds = array<i64: 8, 128>}, {transform_indices = @transform_1, window_bounds = array<i64: 128, 128>}, {transform_indices = @transform_2, window_bounds = array<i64: 1, 128>}, {transform_indices = @transform_3, window_bounds = array<i64: 128, 128>}, {pipeline_mode = #tpu.pipeline_mode<synchronous>, transform_indices = @transform_4, window_bounds = array<i64: 1, 128>}, {pipeline_mode = #tpu.pipeline_mode<synchronous>, transform_indices = @transform_5, window_bounds = array<i64: 1, 128>}, {pipeline_mode = #tpu.pipeline_mode<synchronous>, transform_indices = @transform_6, window_bounds = array<i64: 1, 128>}, {transform_indices = @transform_7, window_bounds = array<i64: 8, 128>}]} {
    %c0 = arith.constant 0 : index
    %c0_0 = arith.constant 0 : index
    %0 = vector.load %arg2[%c0, %c0_0] : memref<8x128xf32, #tpu.memory_space<vmem>>, vector<8x128xf32>
    %c0_1 = arith.constant 0 : index
    %c0_2 = arith.constant 0 : index
    %1 = vector.load %arg3[%c0_1, %c0_2] : memref<128x128xf32, #tpu.memory_space<vmem>>, vector<128x128xf32>
    %cst = arith.constant dense<0.000000e+00> : vector<8x128xf32>
    %2 = tpu.matmul %0, %1, %cst {dimension_numbers = #tpu.dot_dimension_numbers<[1], [0], [0], [1], [0, 0, 1, 1], [], []>} : vector<8x128xf32>, vector<128x128xf32>, vector<8x128xf32> -> vector<8x128xf32>
    %c0_3 = arith.constant 0 : index
    %c0_4 = arith.constant 0 : index
    %3 = vector.load %arg4[%c0_3, %c0_4] : memref<1x128xf32, #tpu.memory_space<vmem>>, vector<1x128xf32>
    %4 = vector.broadcast %3 : vector<1x128xf32> to vector<8x128xf32>
    %5 = arith.addf %2, %4 : vector<8x128xf32>
    %cst_5 = arith.constant 0.000000e+00 : f32
    %6 = vector.broadcast %cst_5 : f32 to vector<8x128xf32>
    %7 = arith.maximumf %5, %6 : vector<8x128xf32>
    %c0_6 = arith.constant 0 : index
    %c0_7 = arith.constant 0 : index
    %8 = vector.load %arg5[%c0_6, %c0_7] : memref<128x128xf32, #tpu.memory_space<vmem>>, vector<128x128xf32>
    %cst_8 = arith.constant dense<0.000000e+00> : vector<8x128xf32>
    %9 = tpu.matmul %7, %8, %cst_8 {dimension_numbers = #tpu.dot_dimension_numbers<[1], [0], [0], [1], [0, 0, 1, 1], [], []>} : vector<8x128xf32>, vector<128x128xf32>, vector<8x128xf32> -> vector<8x128xf32>
    %c0_9 = arith.constant 0 : index
    %c0_10 = arith.constant 0 : index
    %10 = vector.load %arg6[%c0_9, %c0_10] : memref<1x128xf32, #tpu.memory_space<vmem>>, vector<1x128xf32>
    %11 = vector.broadcast %10 : vector<1x128xf32> to vector<8x128xf32>
    %12 = arith.addf %9, %11 : vector<8x128xf32>
    %13 = arith.addf %12, %0 : vector<8x128xf32>
    %c0_11 = arith.constant 0 : index
    %c0_12 = arith.constant 0 : index
    %14 = vector.load %arg7[%c0_11, %c0_12] : memref<1x128xf32, #tpu.memory_space<vmem>>, vector<1x128xf32>
    %c0_13 = arith.constant 0 : index
    %c0_14 = arith.constant 0 : index
    %15 = vector.load %arg8[%c0_13, %c0_14] : memref<1x128xf32, #tpu.memory_space<vmem>>, vector<1x128xf32>
    %cst_15 = arith.constant dense<0.000000e+00> : vector<8xf32>
    %16 = vector.multi_reduction <add>, %13, %cst_15 [1] : vector<8x128xf32> to vector<8xf32>
    %17 = vector.shape_cast %16 : vector<8xf32> to vector<8x1xf32>
    %cst_16 = arith.constant 3.125000e-02 : f32
    %18 = vector.broadcast %cst_16 : f32 to vector<8x1xf32>
    %19 = arith.mulf %17, %18 : vector<8x1xf32>
    %20 = vector.broadcast %19 : vector<8x1xf32> to vector<8x128xf32>
    %21 = arith.subf %13, %20 : vector<8x128xf32>
    %22 = tpu.iota {dimensions = array<i32: 1>} : vector<8x128xi32>
    %c32_i32 = arith.constant 32 : i32
    %23 = vector.broadcast %c32_i32 : i32 to vector<8x128xi32>
    %24 = arith.cmpi slt, %22, %23 : vector<8x128xi32>
    %cst_17 = arith.constant 0.000000e+00 : f32
    %25 = vector.broadcast %cst_17 : f32 to vector<8x128xf32>
    %26 = arith.select %24, %21, %25 : vector<8x128xi1>, vector<8x128xf32>
    %27 = arith.mulf %26, %26 : vector<8x128xf32>
    %cst_18 = arith.constant dense<0.000000e+00> : vector<8xf32>
    %28 = vector.multi_reduction <add>, %27, %cst_18 [1] : vector<8x128xf32> to vector<8xf32>
    %29 = vector.shape_cast %28 : vector<8xf32> to vector<8x1xf32>
    %cst_19 = arith.constant 3.125000e-02 : f32
    %30 = vector.broadcast %cst_19 : f32 to vector<8x1xf32>
    %31 = arith.mulf %29, %30 : vector<8x1xf32>
    %cst_20 = arith.constant 9.99999997E-7 : f32
    %32 = vector.broadcast %cst_20 : f32 to vector<8x1xf32>
    %33 = arith.addf %31, %32 : vector<8x1xf32>
    %34 = math.rsqrt %33 : vector<8x1xf32>
    %35 = vector.broadcast %34 : vector<8x1xf32> to vector<8x128xf32>
    %36 = arith.mulf %21, %35 : vector<8x128xf32>
    %37 = vector.broadcast %14 : vector<1x128xf32> to vector<8x128xf32>
    %38 = arith.mulf %36, %37 : vector<8x128xf32>
    %39 = vector.broadcast %15 : vector<1x128xf32> to vector<8x128xf32>
    %40 = arith.addf %38, %39 : vector<8x128xf32>
    %c0_21 = arith.constant 0 : index
    %c0_22 = arith.constant 0 : index
    %41 = vector.load %arg9[%c0_21, %c0_22] : memref<8x128xf32, #tpu.memory_space<vmem>>, vector<8x128xf32>
    tpu.vector_store %arg9[%c0_21, %c0_22], %40 {strides = array<i32>} : memref<8x128xf32, #tpu.memory_space<vmem>>, vector<8x128xf32>,
    return
  }
  func.func @transform_0(%arg0: i32, %arg1: i32) -> (i32, i32) {
    %c0_i32 = arith.constant 0 : i32
    %c0_i32_0 = arith.constant 0 : i32
    return %arg0, %c0_i32 : i32, i32
  }
  func.func @transform_1(%arg0: i32, %arg1: i32) -> (i32, i32) {
    %c0_i32 = arith.constant 0 : i32
    %c0_i32_0 = arith.constant 0 : i32
    return %c0_i32, %arg1 : i32, i32
  }
  func.func @transform_2(%arg0: i32, %arg1: i32) -> (i32, i32) {
    %c0_i32 = arith.constant 0 : i32
    %c0_i32_0 = arith.constant 0 : i32
    return %c0_i32, %arg1 : i32, i32
  }
  func.func @transform_3(%arg0: i32, %arg1: i32) -> (i32, i32) {
    %c0_i32 = arith.constant 0 : i32
    %c0_i32_0 = arith.constant 0 : i32
    return %arg1, %c0_i32 : i32, i32
  }
  func.func @transform_4(%arg0: i32, %arg1: i32) -> (i32, i32) {
    %c0_i32 = arith.constant 0 : i32
    %c0_i32_0 = arith.constant 0 : i32
    %c0_i32_1 = arith.constant 0 : i32
    return %c0_i32, %c0_i32_0 : i32, i32
  }
  func.func @transform_5(%arg0: i32, %arg1: i32) -> (i32, i32) {
    %c0_i32 = arith.constant 0 : i32
    %c0_i32_0 = arith.constant 0 : i32
    %c0_i32_1 = arith.constant 0 : i32
    return %c0_i32, %c0_i32_0 : i32, i32
  }
  func.func @transform_6(%arg0: i32, %arg1: i32) -> (i32, i32) {
    %c0_i32 = arith.constant 0 : i32
    %c0_i32_0 = arith.constant 0 : i32
    %c0_i32_1 = arith.constant 0 : i32
    return %c0_i32, %c0_i32_0 : i32, i32
  }
  func.func @transform_7(%arg0: i32, %arg1: i32) -> (i32, i32) {
    %c0_i32 = arith.constant 0 : i32
    %c0_i32_0 = arith.constant 0 : i32
    return %arg0, %c0_i32 : i32, i32
  }
}

</mosaic_0001>

<llo_original>
// kernel: tpu_custom_call.1
$region0: #{tpu_custom_call.1}
  #allocation0 [shape = 'u32[]', space=smem, size = 0x4, offset = 0x4, fixed_abs, tag = 'smem constant byte address 0x4 - core index']
  #allocation1 [shape = 'u32[144,128]{1,0:T(1,128)}', space=vmem, size = 0x12000, scoped, tag = 'internal scratch']
  %s0 = inlined_call_operand.hbm [shape: f32[16,128], index: 0, kind: input, shape index: {}]
  %s1 = inlined_call_operand.hbm [shape: f32[128,128], index: 1, kind: input, shape index: {}]
  %s2 = inlined_call_operand.vmem [shape: f32[1,128], index: 2, kind: input, shape index: {}]
  %s3 = inlined_call_operand.hbm [shape: f32[128,128], index: 3, kind: input, shape index: {}]
  %s4 = inlined_call_operand.vmem [shape: f32[1,128], index: 4, kind: input, shape index: {}]
  %s5 = inlined_call_operand.vmem [shape: f32[1,128], index: 5, kind: input, shape index: {}]
  %s6 = inlined_call_operand.vmem [shape: f32[1,128], index: 6, kind: input, shape index: {}]
  %s7 = inlined_call_operand.hbm [shape: f32[16,128], index: 7, kind: output, shape index: {}]
  %s8 = sld [smem:[#allocation0]]
  $region73: #{tpu_custom_call.1} parent=0
    _
  %s10 = ssub.s32 1, %s8
  %s11 = scalar_select 0, %s10, %s8
  $region1: #{tpu_custom_call.1} parent=0
    #allocation2 [shape = 'u8[8192]{0}', space=vmem, size = 0x2000, scoped, tag = 'input window, operand 0']
    #allocation3 [shape = 's32[2]{0}', space=sflag, size = 0x8, scoped, tag = 'scoped memory for tpu_custom_call.1']
    #allocation4 [shape = 's32[2]{0}', space=sflag, size = 0x8, scoped, tag = 'scoped memory for tpu_custom_call.1']
    #allocation5 [shape = 'u8[65536]{0}', space=vmem, size = 0x10000, scoped, tag = 'input window, operand 1, single buffered']
    #allocation6 [shape = 's32[1]{0}', space=sflag, size = 0x4, scoped, tag = 'scoped memory for tpu_custom_call.1']
    #allocation7 [shape = 'u8[65536]{0}', space=vmem, size = 0x10000, scoped, tag = 'input window, operand 3, single buffered']
    #allocation8 [shape = 'u8[8192]{0}', space=vmem, size = 0x2000, scoped, tag = 'output window, operand 0']
    %12 = vsyncpa [#allocation3], 0
    %s13 = scalar_lea.sflag [#allocation3], 1
    %14 = vsyncpa %s13, 0
    %15 = vsyncpa [#allocation6], 0
    %16 = vsyncpa [#allocation4], 0
    %s17 = scalar_lea.sflag [#allocation4], 1
    %18 = vsyncpa %s17, 0
    loop: start=0, step=1, limit=4
    $region2: #{tpu_custom_call.1} parent=1 // loop_pre_header
      _
    $region3: #{tpu_custom_call.1} parent=1 // loop_header
      %s20 = sphi 0, %s24
      %p21 = scmp.ge.s32.totalorder %s20, 4
      %s27 = sphi 0, %s39
      %s28 = sphi 0, %s35
      %s29 = sphi 0, %s27
      %s30 = sphi 0, %s28
      %s31 = sphi 0, %s29
      %s32 = sphi 0, %s30
      %s42 = sphi 0, %s44
      %s45 = sphi 0, %s42
      %s46 = sphi 0, %s45
      %s62 = sphi 0, %s46
      %s68 = sphi 0, %s70
      %s71 = sphi 0, %s68
      %s72 = sphi 0, %s71
      %s88 = sphi 0, %s72
      %s94 = sphi 0, %s96
      %s97 = sphi 0, %s94
      %s98 = sphi 0, %s97
      %s114 = sphi 0, %s98
      %s120 = sphi 0, %s122
      %s123 = sphi 0, %s120
      %s124 = sphi 0, %s123
      %s140 = sphi 0, %s124
      %s144 = sphi 0, %s144
      %s146 = sphi 0, %s144
      %s147 = sphi 0, %s146
      %s161 = sphi 0, %s147
      %s165 = sphi 0, %s165
      %s167 = sphi 0, %s165
      %s168 = sphi 0, %s167
      %s182 = sphi 0, %s168
      %s186 = sphi 0, %s186
      %s188 = sphi 0, %s186
      %s189 = sphi 0, %s188
      %s203 = sphi 0, %s189
      %s209 = sphi 0, %s211
      %s212 = sphi 0, %s209
      %s213 = sphi 0, %s212
      %s229 = sphi 0, %s213
    $region4: #{tpu_custom_call.1} parent=1 // loop_header_branch
      %23 = sbr.rel (%p21) target = $region8
    $region5: #{tpu_custom_call.1} parent=1 // loop_body
      %s25 = ssub.s32 %s20, 1
      %s26 = ssub.s32 %s20, 2
      %s33 = sadd.s32 1, %s28
      %p34 = scmp.ge.s32.totalorder %s33, 1
      %s35 = scalar_select %p34, 0, %s33
      %s36 = sadd.s32 1, %s27
      %s37 = scalar_select %p34, %s36, %s27
      %p38 = scmp.ge.s32.totalorder %s37, 2
      %s39 = scalar_select %p38, 0, %s37
      %s40 = ssub.s32 %s27, %s39
      %p41 = scmp.eq.s32.totalorder %s40, 0
      %s43 = sadd.s32 %s42, 1
      %s44 = scalar_select %p41, %s42, %s43
      %p47 = pneg %p41
      %p48 = scmp.eq.s32.totalorder %s20, 1
      %p49 = por %p47, %p48
      %p50 = scmp.ne.s32.totalorder %s42, %s45
      %p51 = scmp.eq.s32.totalorder %s20, 0
      %p52 = por %p50, %p51
      %p53 = scmp.ne.s32.totalorder %s42, %s45
      %p54 = scmp.eq.s32.totalorder %s25, 1
      %p55 = por %p53, %p54
      %p56 = scmp.ne.s32.totalorder %s45, %s46
      %p57 = scmp.eq.s32.totalorder %s25, 0
      %p58 = por %p56, %p57
      %p59 = scmp.ne.s32.totalorder %s45, %s46
      %p60 = scmp.eq.s32.totalorder %s26, 1
      %p61 = por %p59, %p60
      %p63 = scmp.ne.s32.totalorder %s46, %s62
      %p64 = scmp.eq.s32.totalorder %s26, 0
      %p65 = por %p63, %p64
      %s66 = ssub.s32 %s28, %s35
      %p67 = scmp.eq.s32.totalorder %s66, 0
      %s69 = sadd.s32 %s68, 1
      %s70 = scalar_select %p67, %s68, %s69
      %p73 = pneg %p67
      %p74 = scmp.eq.s32.totalorder %s20, 1
      %p75 = por %p73, %p74
      %p76 = scmp.ne.s32.totalorder %s68, %s71
      %p77 = scmp.eq.s32.totalorder %s20, 0
      %p78 = por %p76, %p77
      %p79 = scmp.ne.s32.totalorder %s68, %s71
      %p80 = scmp.eq.s32.totalorder %s25, 1
      %p81 = por %p79, %p80
      %p82 = scmp.ne.s32.totalorder %s71, %s72
      %p83 = scmp.eq.s32.totalorder %s25, 0
      %p84 = por %p82, %p83
      %p85 = scmp.ne.s32.totalorder %s71, %s72
      %p86 = scmp.eq.s32.totalorder %s26, 1
      %p87 = por %p85, %p86
      %p89 = scmp.ne.s32.totalorder %s72, %s88
      %p90 = scmp.eq.s32.totalorder %s26, 0
      %p91 = por %p89, %p90
      %s92 = ssub.s32 %s28, %s35
      %p93 = scmp.eq.s32.totalorder %s92, 0
      %s95 = sadd.s32 %s94, 1
      %s96 = scalar_select %p93, %s94, %s95
      %p99 = pneg %p93
      %p100 = scmp.eq.s32.totalorder %s20, 1
      %p101 = por %p99, %p100
      %p102 = scmp.ne.s32.totalorder %s94, %s97
      %p103 = scmp.eq.s32.totalorder %s20, 0
      %p104 = por %p102, %p103
      %p105 = scmp.ne.s32.totalorder %s94, %s97
      %p106 = scmp.eq.s32.totalorder %s25, 1
      %p107 = por %p105, %p106
      %p108 = scmp.ne.s32.totalorder %s97, %s98
      %p109 = scmp.eq.s32.totalorder %s25, 0
      %p110 = por %p108, %p109
      %p111 = scmp.ne.s32.totalorder %s97, %s98
      %p112 = scmp.eq.s32.totalorder %s26, 1
      %p113 = por %p111, %p112
      %p115 = scmp.ne.s32.totalorder %s98, %s114
      %p116 = scmp.eq.s32.totalorder %s26, 0
      %p117 = por %p115, %p116
      %s118 = ssub.s32 %s28, %s35
      %p119 = scmp.eq.s32.totalorder %s118, 0
      %s121 = sadd.s32 %s120, 1
      %s122 = scalar_select %p119, %s120, %s121
      %p125 = pneg %p119
      %p126 = scmp.eq.s32.totalorder %s20, 1
      %p127 = por %p125, %p126
      %p128 = scmp.ne.s32.totalorder %s120, %s123
      %p129 = scmp.eq.s32.totalorder %s20, 0
      %p130 = por %p128, %p129
      %p131 = scmp.ne.s32.totalorder %s120, %s123
      %p132 = scmp.eq.s32.totalorder %s25, 1
      %p133 = por %p131, %p132
      %p134 = scmp.ne.s32.totalorder %s123, %s124
      %p135 = scmp.eq.s32.totalorder %s25, 0
      %p136 = por %p134, %p135
      %p137 = scmp.ne.s32.totalorder %s123, %s124
      %p138 = scmp.eq.s32.totalorder %s26, 1
      %p139 = por %p137, %p138
      %p141 = scmp.ne.s32.totalorder %s124, %s140
      %p142 = scmp.eq.s32.totalorder %s26, 0
      %p143 = por %p141, %p142
      %s145 = sadd.s32 %s144, 1
      %p148 = scmp.eq.s32.totalorder %s20, 1
      %p149 = scmp.ne.s32.totalorder %s144, %s146
      %p150 = scmp.eq.s32.totalorder %s20, 0
      %p151 = por %p149, %p150
      %p152 = scmp.ne.s32.totalorder %s144, %s146
      %p153 = scmp.eq.s32.totalorder %s25, 1
      %p154 = por %p152, %p153
      %p155 = scmp.ne.s32.totalorder %s146, %s147
      %p156 = scmp.eq.s32.totalorder %s25, 0
      %p157 = por %p155, %p156
      %p158 = scmp.ne.s32.totalorder %s146, %s147
      %p159 = scmp.eq.s32.totalorder %s26, 1
      %p160 = por %p158, %p159
      %p162 = scmp.ne.s32.totalorder %s147, %s161
      %p163 = scmp.eq.s32.totalorder %s26, 0
      %p164 = por %p162, %p163
      %s166 = sadd.s32 %s165, 1
      %p169 = scmp.eq.s32.totalorder %s20, 1
      %p170 = scmp.ne.s32.totalorder %s165, %s167
      %p171 = scmp.eq.s32.totalorder %s20, 0
      %p172 = por %p170, %p171
      %p173 = scmp.ne.s32.totalorder %s165, %s167
      %p174 = scmp.eq.s32.totalorder %s25, 1
      %p175 = por %p173, %p174
      %p176 = scmp.ne.s32.totalorder %s167, %s168
      %p177 = scmp.eq.s32.totalorder %s25, 0
      %p178 = por %p176, %p177
      %p179 = scmp.ne.s32.totalorder %s167, %s168
      %p180 = scmp.eq.s32.totalorder %s26, 1
      %p181 = por %p179, %p180
      %p183 = scmp.ne.s32.totalorder %s168, %s182
      %p184 = scmp.eq.s32.totalorder %s26, 0
      %p185 = por %p183, %p184
      %s187 = sadd.s32 %s186, 1
      %p190 = scmp.eq.s32.totalorder %s20, 1
      %p191 = scmp.ne.s32.totalorder %s186, %s188
      %p192 = scmp.eq.s32.totalorder %s20, 0
      %p193 = por %p191, %p192
      %p194 = scmp.ne.s32.totalorder %s186, %s188
      %p195 = scmp.eq.s32.totalorder %s25, 1
      %p196 = por %p194, %p195
      %p197 = scmp.ne.s32.totalorder %s188, %s189
      %p198 = scmp.eq.s32.totalorder %s25, 0
      %p199 = por %p197, %p198
      %p200 = scmp.ne.s32.totalorder %s188, %s189
      %p201 = scmp.eq.s32.totalorder %s26, 1
      %p202 = por %p200, %p201
      %p204 = scmp.ne.s32.totalorder %s189, %s203
      %p205 = scmp.eq.s32.totalorder %s26, 0
      %p206 = por %p204, %p205
      %s207 = ssub.s32 %s27, %s39
      %p208 = scmp.eq.s32.totalorder %s207, 0
      %s210 = sadd.s32 %s209, 1
      %s211 = scalar_select %p208, %s209, %s210
      %p214 = pneg %p208
      %p215 = scmp.eq.s32.totalorder %s20, 1
      %p216 = por %p214, %p215
      %p217 = scmp.ne.s32.totalorder %s209, %s212
      %p218 = scmp.eq.s32.totalorder %s20, 0
      %p219 = por %p217, %p218
      %p220 = scmp.ne.s32.totalorder %s209, %s212
      %p221 = scmp.eq.s32.totalorder %s25, 1
      %p222 = por %p220, %p221
      %p223 = scmp.ne.s32.totalorder %s212, %s213
      %p224 = scmp.eq.s32.totalorder %s25, 0
      %p225 = por %p223, %p224
      %p226 = scmp.ne.s32.totalorder %s212, %s213
      %p227 = scmp.eq.s32.totalorder %s26, 1
      %p228 = por %p226, %p227
      %p230 = scmp.ne.s32.totalorder %s213, %s229
      %p231 = scmp.eq.s32.totalorder %s26, 0
      %p232 = por %p230, %p231
      %p233 = scmp.le.s32.totalorder 1, %s20
      %p234 = scmp.lt.s32.totalorder %s20, 3
      %p235 = pnand %p233, %p234
      %p236 = pneg %p235
      // Predicated region
      $region9: #{tpu_custom_call.1} parent=5 // pred_check
        _
      $region10: #{tpu_custom_call.1} parent=5 // pred_check_branch
        %238 = sbr.rel (%p235) target = $region12
      $region11: #{tpu_custom_call.1} parent=5 // pred_region
        %s239 = ssub.s32 %s20, 1
        // Predicated region
        $region13: #{tpu_custom_call.1} parent=11 // pred_check
          %p240 = pneg %p84
        $region14: #{tpu_custom_call.1} parent=11 // pred_check_branch
          %242 = sbr.rel (%p240) target = $region16
        $region15: #{tpu_custom_call.1} parent=11 // pred_region
          %s244 = ssub.s32 2048, 2048
          %245 = vsyncadd [#allocation6], %s244
          %s246 = smul.addr %s30, 128
          %s247 = scalar_lea.hbm %s1, %s246
          %s248 = sshll.u32 [#allocation5], 4
          %s249 = int_to_ptr.vmem [resolvable:$true] %s248
          %254 = dma.hbm_to_vmem [thread:$0]  %s247, 2048, %s249, [#allocation6], 128, 128, 8
        $region16: #{tpu_custom_call.1} parent=11 // pred_fallthru
          _
        // Predicated region
        $region17: #{tpu_custom_call.1} parent=11 // pred_check
          %p255 = pneg %p110
        $region18: #{tpu_custom_call.1} parent=11 // pred_check_branch
          %257 = sbr.rel (%p255) target = $region20
        $region19: #{tpu_custom_call.1} parent=11 // pred_region
          %p258 = scmp.lt.s32.totalorder %s30, 0
          %s259 = scalar_select %p258, %s30, 0
          %s260 = scalar_lea.vmem %s2, %s259
        $region20: #{tpu_custom_call.1} parent=11 // pred_fallthru
          _
        // Predicated region
        $region21: #{tpu_custom_call.1} parent=11 // pred_check
          %p261 = pneg %p136
        $region22: #{tpu_custom_call.1} parent=11 // pred_check_branch
          %263 = sbr.rel (%p261) target = $region24
        $region23: #{tpu_custom_call.1} parent=11 // pred_region
          %s264 = smul.u32 16, %s30
          %s266 = ssub.s32 2048, 2048
          %267 = vsyncadd [#allocation6], %s266
          %s268 = smul.addr %s264, 128
          %s269 = scalar_lea.hbm %s3, %s268
          %s270 = sshll.u32 [#allocation7], 4
          %s271 = int_to_ptr.vmem [resolvable:$true] %s270
          %276 = dma.hbm_to_vmem [thread:$0]  %s269, 2048, %s271, [#allocation6], 128, 128, 8
        $region24: #{tpu_custom_call.1} parent=11 // pred_fallthru
          _
        // Predicated region
        $region25: #{tpu_custom_call.1} parent=11 // pred_check
          %p277 = pneg %p157
        $region26: #{tpu_custom_call.1} parent=11 // pred_check_branch
          %279 = sbr.rel (%p277) target = $region28
        $region27: #{tpu_custom_call.1} parent=11 // pred_region
          _
        $region28: #{tpu_custom_call.1} parent=11 // pred_fallthru
          _
        // Predicated region
        $region29: #{tpu_custom_call.1} parent=11 // pred_check
          %p280 = pneg %p178
        $region30: #{tpu_custom_call.1} parent=11 // pred_check_branch
          %282 = sbr.rel (%p280) target = $region32
        $region31: #{tpu_custom_call.1} parent=11 // pred_region
          _
        $region32: #{tpu_custom_call.1} parent=11 // pred_fallthru
          _
        // Predicated region
        $region33: #{tpu_custom_call.1} parent=11 // pred_check
          %p283 = pneg %p199
        $region34: #{tpu_custom_call.1} parent=11 // pred_check_branch
          %285 = sbr.rel (%p283) target = $region36
        $region35: #{tpu_custom_call.1} parent=11 // pred_region
          _
        $region36: #{tpu_custom_call.1} parent=11 // pred_fallthru
          _
      $region12: #{tpu_custom_call.1} parent=5 // pred_fallthru
        _
      %p286 = scmp.lt.s32.totalorder %s20, 2
      // Predicated region
      $region37: #{tpu_custom_call.1} parent=5 // pred_check
        %p287 = pneg %p286
      $region38: #{tpu_custom_call.1} parent=5 // pred_check_branch
        %289 = sbr.rel (%p287) target = $region40
      $region39: #{tpu_custom_call.1} parent=5 // pred_region
        // Predicated region
        $region41: #{tpu_custom_call.1} parent=39 // pred_check
          %p290 = pneg %p52
        $region42: #{tpu_custom_call.1} parent=39 // pred_check_branch
          %292 = sbr.rel (%p290) target = $region44
        $region43: #{tpu_custom_call.1} parent=39 // pred_region
          %s293 = sand.u32 %s42, 1
          %s294 = scalar_lea.sflag [#allocation3], %s293
          %s295 = sand.u32 %s42, 1
          %s296 = smul.addr %s295, 8
          %s297 = scalar_lea.vmem [#allocation2], %s296
          %s299 = ssub.s32 128, 128
          %300 = vsyncadd %s294, %s299
          %s301 = smul.addr %s27, 128
          %s302 = scalar_lea.hbm %s0, %s301
          %s304 = sshll.u32 %s297, 4
          %s305 = int_to_ptr.vmem [resolvable:$true] %s304
          %307 = dma.hbm_to_vmem [thread:$0]  %s302, 128, %s305, %s294
        $region44: #{tpu_custom_call.1} parent=39 // pred_fallthru
          _
      $region40: #{tpu_custom_call.1} parent=5 // pred_fallthru
        _
      %p308 = scmp.le.s32.totalorder 1, %s20
      %p309 = scmp.lt.s32.totalorder %s20, 3
      %p310 = pnand %p308, %p309
      %p311 = pneg %p310
      // Predicated region
      $region45: #{tpu_custom_call.1} parent=5 // pred_check
        _
      $region46: #{tpu_custom_call.1} parent=5 // pred_check_branch
        %313 = sbr.rel (%p310) target = $region48
      $region47: #{tpu_custom_call.1} parent=5 // pred_region
        %s314 = ssub.s32 %s20, 1
        %s315 = sand.u32 %s45, 1
        %s316 = scalar_lea.sflag [#allocation3], %s315
        %s317 = sand.u32 %s45, 1
        %s318 = smul.addr %s317, 8
        %s319 = scalar_lea.vmem [#allocation2], %s318
        // Predicated region
        $region49: #{tpu_custom_call.1} parent=47 // pred_check
          %p320 = pneg %p58
        $region50: #{tpu_custom_call.1} parent=47 // pred_check_branch
          %322 = sbr.rel (%p320) target = $region52
        $region51: #{tpu_custom_call.1} parent=47 // pred_region
          %323 = dma.done %s316, 128
        $region52: #{tpu_custom_call.1} parent=47 // pred_fallthru
          _
        // Predicated region
        $region53: #{tpu_custom_call.1} parent=47 // pred_check
          %p324 = pneg %p84
        $region54: #{tpu_custom_call.1} parent=47 // pred_check_branch
          %326 = sbr.rel (%p324) target = $region56
        $region55: #{tpu_custom_call.1} parent=47 // pred_region
          %327 = dma.done [#allocation6], 2048
        $region56: #{tpu_custom_call.1} parent=47 // pred_fallthru
          _
        // Predicated region
        $region57: #{tpu_custom_call.1} parent=47 // pred_check
          %p328 = pneg %p136
        $region58: #{tpu_custom_call.1} parent=47 // pred_check_branch
          %330 = sbr.rel (%p328) target = $region60
        $region59: #{tpu_custom_call.1} parent=47 // pred_region
          %331 = dma.done [#allocation6], 2048
        $region60: #{tpu_custom_call.1} parent=47 // pred_fallthru
          _
        %s332 = sand.u32 %s45, 1
        %s333 = scalar_lea.sflag [#allocation3], %s332
        %s334 = sand.u32 %s45, 1
        %s335 = smul.addr %s334, 8
        %s336 = scalar_lea.vmem [#allocation2], %s335
        %p337 = pneg %p58
        %p338 = pneg %p55
        %p339 = pneg %p84
        %p340 = pneg %p81
        %p341 = scmp.lt.s32.totalorder %s30, 0
        %s342 = scalar_select %p341, %s30, 0
        %s343 = scalar_lea.vmem %s2, %s342
        %p344 = pneg %p110
        %p345 = pneg %p107
        %p346 = pneg %p136
        %p347 = pneg %p133
        %p348 = pneg %p157
        %p349 = pneg %p154
        %p350 = pneg %p178
        %p351 = pneg %p175
        %p352 = pneg %p199
        %p353 = pneg %p196
        %p354 = pneg %p225
        %p355 = pneg %p222
        %s356 = sand.u32 %s212, 1
        %s357 = scalar_lea.sflag [#allocation4], %s356
        %s358 = sand.u32 %s212, 1
        %s359 = smul.addr %s358, 8
        %s360 = scalar_lea.vmem [#allocation8], %s359
        %p361 = scmp.lt.s32.totalorder %s30, 0
        %s362 = scalar_select %p361, %s30, 0
        %s363 = scalar_lea.vmem %s2, %s362
        %s364 = smul.u32 16, %s30
        %v365 = vld [vmem:[%s319] sm:$0xff]
        %v366 = vld [vmem:[#allocation5] sm:$0xff]
        %v367 = vld [vmem:[#allocation5 + $0x8] sm:$0xff]
        %v368 = vld [vmem:[#allocation5 + $0x10] sm:$0xff]
        %v369 = vld [vmem:[#allocation5 + $0x18] sm:$0xff]
        %v370 = vld [vmem:[#allocation5 + $0x20] sm:$0xff]
        %v371 = vld [vmem:[#allocation5 + $0x28] sm:$0xff]
        %v372 = vld [vmem:[#allocation5 + $0x30] sm:$0xff]
        %v373 = vld [vmem:[#allocation5 + $0x38] sm:$0xff]
        %v374 = vld [vmem:[#allocation5 + $0x40] sm:$0xff]
        %v375 = vld [vmem:[#allocation5 + $0x48] sm:$0xff]
        %v376 = vld [vmem:[#allocation5 + $0x50] sm:$0xff]
        %v377 = vld [vmem:[#allocation5 + $0x58] sm:$0xff]
        %v378 = vld [vmem:[#allocation5 + $0x60] sm:$0xff]
        %v379 = vld [vmem:[#allocation5 + $0x68] sm:$0xff]
        %v380 = vld [vmem:[#allocation5 + $0x70] sm:$0xff]
        %v381 = vld [vmem:[#allocation5 + $0x78] sm:$0xff]
        %v382 = vld [vmem:[%s363] sm:$0x1]
        %v384 = vlaneseq
        %v385 = vshrl.u32 %v384, 7
        %v386 = vsub.s32 0, %v385
        %v387 = vrot.slane %v382, %v386
        %389 = vmatprep.subr.mxu0 0.0
        %390 = vmatpush1.msra.mxu0 %v381
        %391 = vmatprep.subr.mxu0 0.0
        %392 = vmatpush1.msra.mxu0 %v380
        %393 = vmatprep.subr.mxu0 0.0
        %394 = vmatpush1.msra.mxu0 %v379
        %395 = vmatprep.subr.mxu0 0.0
        %396 = vmatpush1.msra.mxu0 %v378
        %397 = vmatprep.subr.mxu0 0.0
        %398 = vmatpush1.msra.mxu0 %v377
        %399 = vmatprep.subr.mxu0 0.0
        %400 = vmatpush1.msra.mxu0 %v376
        %401 = vmatprep.subr.mxu0 0.0
        %402 = vmatpush1.msra.mxu0 %v375
        %403 = vmatprep.subr.mxu0 0.0
        %404 = vmatpush1.msra.mxu0 %v374
        %405 = vmatprep.subr.mxu0 0.0
        %406 = vmatpush1.msra.mxu0 %v373
        %407 = vmatprep.subr.mxu0 0.0
        %408 = vmatpush1.msra.mxu0 %v372
        %409 = vmatprep.subr.mxu0 0.0
        %410 = vmatpush1.msra.mxu0 %v371
        %411 = vmatprep.subr.mxu0 0.0
        %412 = vmatpush1.msra.mxu0 %v370
        %413 = vmatprep.subr.mxu0 0.0
        %414 = vmatpush1.msra.mxu0 %v369
        %415 = vmatprep.subr.mxu0 0.0
        %416 = vmatpush1.msra.mxu0 %v368
        %417 = vmatprep.subr.mxu0 0.0
        %418 = vmatpush1.msra.mxu0 %v367
        %419 = vmatprep.subr.mxu0 0.0
        %420 = vmatpush1.msra.mxu0 %v366
        %421 = vmatprep.subr.mxu0 0.0
        %422 = vmatpush2.msra.mxu0 0.0
        %423 = vmatprep.subr.mxu0 0.0
        %424 = vmatpush2.msra.mxu0 0.0
        %425 = vmatprep.subr.mxu0 0.0
        %426 = vmatpush2.msra.mxu0 0.0
        %427 = vmatprep.subr.mxu0 0.0
        %428 = vmatpush2.msra.mxu0 0.0
        %429 = vmatprep.subr.mxu0 0.0
        %430 = vmatpush2.msra.mxu0 0.0
        %431 = vmatprep.subr.mxu0 0.0
        %432 = vmatpush2.msra.mxu0 0.0
        %433 = vmatprep.subr.mxu0 0.0
        %434 = vmatpush2.msra.mxu0 0.0
        %435 = vmatprep.subr.mxu0 0.0
        %436 = vmatpush2.msra.mxu0 0.0
        %437 = vmatprep.subr.mxu0 0.0
        %438 = vmatpush2.msra.mxu0 0.0
        %439 = vmatprep.subr.mxu0 0.0
        %440 = vmatpush2.msra.mxu0 0.0
        %441 = vmatprep.subr.mxu0 0.0
        %442 = vmatpush2.msra.mxu0 0.0
        %443 = vmatprep.subr.mxu0 0.0
        %444 = vmatpush2.msra.mxu0 0.0
        %445 = vmatprep.subr.mxu0 0.0
        %446 = vmatpush2.msra.mxu0 0.0
        %447 = vmatprep.subr.mxu0 0.0
        %448 = vmatpush2.msra.mxu0 0.0
        %449 = vmatprep.subr.mxu0 0.0
        %450 = vmatpush2.msra.mxu0 0.0
        %451 = vmatprep.subr.mxu0 0.0
        %452 = vmatpush2.msra.mxu0 0.0
        %453 = vmatprep.mubr.f32.mxu0 0.0
        %454 = vmatmul.mubr.f32.gmra.mxu0 %v365
        %v455 = vpop.f32.mrf.mxu0
        %v456 = vadd.f32 %v387, %v455
        %v457 = vpop.f32.mrf.mxu0
        %458 = vdwg.mxu0
        %v459 = vmax.f32 %v456, 0.0
        %v460 = vld [vmem:[#allocation7] sm:$0xff]
        %v461 = vld [vmem:[#allocation7 + $0x8] sm:$0xff]
        %v462 = vld [vmem:[#allocation7 + $0x10] sm:$0xff]
        %v463 = vld [vmem:[#allocation7 + $0x18] sm:$0xff]
        %v464 = vld [vmem:[#allocation7 + $0x20] sm:$0xff]
        %v465 = vld [vmem:[#allocation7 + $0x28] sm:$0xff]
        %v466 = vld [vmem:[#allocation7 + $0x30] sm:$0xff]
        %v467 = vld [vmem:[#allocation7 + $0x38] sm:$0xff]
        %v468 = vld [vmem:[#allocation7 + $0x40] sm:$0xff]
        %v469 = vld [vmem:[#allocation7 + $0x48] sm:$0xff]
        %v470 = vld [vmem:[#allocation7 + $0x50] sm:$0xff]
        %v471 = vld [vmem:[#allocation7 + $0x58] sm:$0xff]
        %v472 = vld [vmem:[#allocation7 + $0x60] sm:$0xff]
        %v473 = vld [vmem:[#allocation7 + $0x68] sm:$0xff]
        %v474 = vld [vmem:[#allocation7 + $0x70] sm:$0xff]
        %v475 = vld [vmem:[#allocation7 + $0x78] sm:$0xff]
        %v476 = vld [vmem:[%s4] sm:$0x1]
        %v478 = vlaneseq
        %v479 = vshrl.u32 %v478, 7
        %v480 = vsub.s32 0, %v479
        %v481 = vrot.slane %v476, %v480
        %483 = vmatprep.subr.mxu0 0.0
        %484 = vmatpush1.msra.mxu0 %v475
        %485 = vmatprep.subr.mxu0 0.0
        %486 = vmatpush1.msra.mxu0 %v474
        %487 = vmatprep.subr.mxu0 0.0
        %488 = vmatpush1.msra.mxu0 %v473
        %489 = vmatprep.subr.mxu0 0.0
        %490 = vmatpush1.msra.mxu0 %v472
        %491 = vmatprep.subr.mxu0 0.0
        %492 = vmatpush1.msra.mxu0 %v471
        %493 = vmatprep.subr.mxu0 0.0
        %494 = vmatpush1.msra.mxu0 %v470
        %495 = vmatprep.subr.mxu0 0.0
        %496 = vmatpush1.msra.mxu0 %v469
        %497 = vmatprep.subr.mxu0 0.0
        %498 = vmatpush1.msra.mxu0 %v468
        %499 = vmatprep.subr.mxu0 0.0
        %500 = vmatpush1.msra.mxu0 %v467
        %501 = vmatprep.subr.mxu0 0.0
        %502 = vmatpush1.msra.mxu0 %v466
        %503 = vmatprep.subr.mxu0 0.0
        %504 = vmatpush1.msra.mxu0 %v465
        %505 = vmatprep.subr.mxu0 0.0
        %506 = vmatpush1.msra.mxu0 %v464
        %507 = vmatprep.subr.mxu0 0.0
        %508 = vmatpush1.msra.mxu0 %v463
        %509 = vmatprep.subr.mxu0 0.0
        %510 = vmatpush1.msra.mxu0 %v462
        %511 = vmatprep.subr.mxu0 0.0
        %512 = vmatpush1.msra.mxu0 %v461
        %513 = vmatprep.subr.mxu0 0.0
        %514 = vmatpush1.msra.mxu0 %v460
        %515 = vmatprep.subr.mxu0 0.0
        %516 = vmatpush2.msra.mxu0 0.0
        %517 = vmatprep.subr.mxu0 0.0
        %518 = vmatpush2.msra.mxu0 0.0
        %519 = vmatprep.subr.mxu0 0.0
        %520 = vmatpush2.msra.mxu0 0.0
        %521 = vmatprep.subr.mxu0 0.0
        %522 = vmatpush2.msra.mxu0 0.0
        %523 = vmatprep.subr.mxu0 0.0
        %524 = vmatpush2.msra.mxu0 0.0
        %525 = vmatprep.subr.mxu0 0.0
        %526 = vmatpush2.msra.mxu0 0.0
        %527 = vmatprep.subr.mxu0 0.0
        %528 = vmatpush2.msra.mxu0 0.0
        %529 = vmatprep.subr.mxu0 0.0
        %530 = vmatpush2.msra.mxu0 0.0
        %531 = vmatprep.subr.mxu0 0.0
        %532 = vmatpush2.msra.mxu0 0.0
        %533 = vmatprep.subr.mxu0 0.0
        %534 = vmatpush2.msra.mxu0 0.0
        %535 = vmatprep.subr.mxu0 0.0
        %536 = vmatpush2.msra.mxu0 0.0
        %537 = vmatprep.subr.mxu0 0.0
        %538 = vmatpush2.msra.mxu0 0.0
        %539 = vmatprep.subr.mxu0 0.0
        %540 = vmatpush2.msra.mxu0 0.0
        %541 = vmatprep.subr.mxu0 0.0
        %542 = vmatpush2.msra.mxu0 0.0
        %543 = vmatprep.subr.mxu0 0.0
        %544 = vmatpush2.msra.mxu0 0.0
        %545 = vmatprep.subr.mxu0 0.0
        %546 = vmatpush2.msra.mxu0 0.0
        %547 = vmatprep.mubr.f32.mxu0 0.0
        %548 = vmatmul.mubr.f32.gmra.mxu0 %v459
        %v549 = vpop.f32.mrf.mxu0
        %v550 = vadd.f32 %v481, %v549
        %v551 = vpop.f32.mrf.mxu0
        %552 = vdwg.mxu0
        %v553 = vadd.f32 %v550, %v365
        %v554 = vld [vmem:[%s5] sm:$0x1]
        %v555 = vld [vmem:[%s6] sm:$0x1]
        %556 = vadd.xlane.f32.xlu0 %v553
        %v557 = vpop.xlane.xlu0 %556
        %v558 = vmul.f32 %v557, 0.03125
        %v559 = vsub.f32 %v553, %v558
        %v560 = vlaneseq
        %v561 = vand.u32 %v560, 127
        %vm562 = vcmp.lt.s32.totalorder %v561, 32
        %v563 = vsel %vm562, %v559, 0.0
        %v564 = vmul.f32 %v563, %v563
        %565 = vadd.xlane.f32.xlu0 %v564
        %v566 = vpop.xlane.xlu0 %565
        %v567 = vmul.f32 %v566, 0.03125
        %v568 = vadd.f32 %v567, 1e-06
        %v569 = vrsqrt.pop %v568
        %v570 = vmul.f32 %v559, %v569
        %v572 = vlaneseq
        %v573 = vshrl.u32 %v572, 7
        %v574 = vsub.s32 0, %v573
        %v575 = vrot.slane %v554, %v574
        %v577 = vmul.f32 %v570, %v575
        %v579 = vlaneseq
        %v580 = vshrl.u32 %v579, 7
        %v581 = vsub.s32 0, %v580
        %v582 = vrot.slane %v555, %v581
        %v584 = vadd.f32 %v577, %v582
        %585 = vst [vmem:[%s360] sm:$0xff] %v584
        %s586 = sand.u32 %s212, 1
        %s587 = scalar_lea.sflag [#allocation4], %s586
        %s588 = sand.u32 %s212, 1
        %s589 = smul.addr %s588, 8
        %s590 = scalar_lea.vmem [#allocation8], %s589
        // Predicated region
        $region61: #{tpu_custom_call.1} parent=47 // pred_check
          %p591 = pneg %p222
        $region62: #{tpu_custom_call.1} parent=47 // pred_check_branch
          %593 = sbr.rel (%p591) target = $region64
        $region63: #{tpu_custom_call.1} parent=47 // pred_region
          %s595 = ssub.s32 128, 128
          %596 = vsyncadd %s587, %s595
          %s597 = smul.addr %s29, 128
          %s598 = scalar_lea.hbm %s7, %s597
          %s600 = sshll.u32 %s590, 4
          %s601 = int_to_ptr.vmem [resolvable:$true] %s600
          %603 = dma.vmem_to_hbm [thread:$0]  %s601, 128, %s598, %s587
        $region64: #{tpu_custom_call.1} parent=47 // pred_fallthru
          _
      $region48: #{tpu_custom_call.1} parent=5 // pred_fallthru
        _
      %p604 = scmp.le.s32.totalorder 2, %s20
      // Predicated region
      $region65: #{tpu_custom_call.1} parent=5 // pred_check
        %p605 = pneg %p604
      $region66: #{tpu_custom_call.1} parent=5 // pred_check_branch
        %607 = sbr.rel (%p605) target = $region68
      $region67: #{tpu_custom_call.1} parent=5 // pred_region
        %s608 = ssub.s32 %s20, 2
        // Predicated region
        $region69: #{tpu_custom_call.1} parent=67 // pred_check
          %p609 = pneg %p228
        $region70: #{tpu_custom_call.1} parent=67 // pred_check_branch
          %611 = sbr.rel (%p609) target = $region72
        $region71: #{tpu_custom_call.1} parent=67 // pred_region
          %s612 = sand.u32 %s213, 1
          %s613 = scalar_lea.sflag [#allocation4], %s612
          %s614 = sand.u32 %s213, 1
          %s615 = smul.addr %s614, 8
          %s616 = scalar_lea.vmem [#allocation8], %s615
          %617 = dma.done %s613, 128
        $region72: #{tpu_custom_call.1} parent=67 // pred_fallthru
          _
      $region68: #{tpu_custom_call.1} parent=5 // pred_fallthru
        _
    $region6: #{tpu_custom_call.1} parent=1 // loop_footer
      %s24 = sadd.s32 1, %s20
    $region7: #{tpu_custom_call.1} parent=1 // loop_footer_branch
      %19 = sbr.rel target = $region3
    $region8: #{tpu_custom_call.1} parent=1 // loop_exit
      _
    %618 = vsyncpa [#allocation3], 1
    %s619 = scalar_lea.sflag [#allocation3], 1
    %620 = vsyncpa %s619, 1
    %621 = vsyncpa [#allocation6], 1
    %622 = vsyncpa [#allocation4], 1
    %s623 = scalar_lea.sflag [#allocation4], 1
    %624 = vsyncpa %s623, 1

</llo_original>
